<compile_context>
chip_gen: v5e
topology: v5e:2x2
jax: 0.10.0
libtpu: 0.0.40
codegen_flags: <defaults>
</compile_context>

<pallas_src>
import math

import jax
import jax.numpy as jnp
from jax.experimental import pallas as pl
from jax.experimental.pallas import tpu as pltpu

# Small, module-consistent shapes: embed_dim=32, num_heads=4 -> head_dim=8.
B, S, E, H = 2, 8, 32, 4
D = E // H
SCALE = 1.0 / math.sqrt(D)  # SDPA default scaling


def _attn_kernel(x_ref, wqkv_ref, bqkv_ref, woh_ref, bo_ref, o_ref, heads_ref):
    # x_ref: (B*S, E) -- all batches/positions in one block, single invocation.
    x = x_ref[...]

    # Fused QKV projection: one (B*S, E) @ (E, 3E) MXU push (96 output lanes).
    # Columns are packed head-major: per head h a [q_h | k_h | v_h] block of 3*D.
    qkv = jnp.dot(x, wqkv_ref[...], preferred_element_type=jnp.float32) + bqkv_ref[...]

    # Regroup lanes into a head-batched layout via a VMEM scratch: one static
    # lane slice + store per head (no per-head matmuls / transposes).
    for h in range(H):
        heads_ref[h] = qkv[:, h * 3 * D:(h + 1) * 3 * D].reshape(B, S, 3 * D)
    hb = heads_ref[...].reshape(H * B, S, 3 * D)       # (H*B, S, 3D)
    q = hb[:, :, 0:D]
    k = hb[:, :, D:2 * D]
    v = hb[:, :, 2 * D:3 * D]

    # Scaled dot-product attention for all (head, batch) pairs in one batched
    # contraction each; no explicit .T is materialized.
    s = jnp.einsum("nqd,nkd->nqk", q, k, preferred_element_type=jnp.float32) * SCALE
    s = s - jnp.max(s, axis=-1, keepdims=True)
    p = jnp.exp(s)
    p = p * pl.reciprocal(jnp.sum(p, axis=-1, keepdims=True), approx=True)      # EUP, not VPU divide
    o = jnp.einsum("nqk,nkd->nqd", p, v, preferred_element_type=jnp.float32)    # (H*B, S, D)

    # Output projection: per-head matmul against the matching Wo row block,
    # then sum over heads (== concat(heads) @ Wo without the lane concatenate).
    o_h = o.reshape(H, B * S, D)                                                # (H, B*S, D)
    parts = jnp.einsum("hrd,hde->hre", o_h, woh_ref[...],
                       preferred_element_type=jnp.float32)                      # (H, B*S, E)
    out = jnp.sum(parts, axis=0) + bo_ref[...]
    o_ref[...] = out.astype(o_ref.dtype)


def _pack_qkv_weights(wq, wk, wv):
    # (E, E) each in (in, out) layout -> (E, 3E) with head-major column blocks.
    wh = jnp.stack([wq.reshape(E, H, D), wk.reshape(E, H, D), wv.reshape(E, H, D)], axis=2)
    return wh.reshape(E, 3 * E)


def _pack_qkv_bias(bq, bk, bv):
    bh = jnp.stack([bq.reshape(H, D), bk.reshape(H, D), bv.reshape(H, D)], axis=1)
    return bh.reshape(1, 3 * E)


def pegasus_attention_forward(hidden_states, wq, bq, wk, bk, wv, bv, wo, bo):
    """hidden_states: (B, S, E) float32. Weights are (in, out) = (E, E); biases (E,)."""
    w_qkv = _pack_qkv_weights(wq, wk, wv)          # (E, 3E), head-major columns
    b_qkv = _pack_qkv_bias(bq, bk, bv)             # (1, 3E)
    wo_heads = wo.reshape(H, D, E)                 # Wo row block per head
    bo2 = bo.reshape(1, E)

    x2d = hidden_states.reshape(B * S, E)          # lane-dense single block, no grid

    out2d = pl.pallas_call(
        _attn_kernel,
        out_shape=jax.ShapeDtypeStruct((B * S, E), hidden_states.dtype),
        scratch_shapes=[pltpu.VMEM((H, B, S, 3 * D), jnp.float32)],
    )(x2d, w_qkv, b_qkv, wo_heads, bo2)

    # TODO(synk): bart_forward also returns (attn_weights=None, past_key_value)
    # and supports an attention_mask; only the unmasked (eval-mode, dropout=0)
    # attention output tensor is produced here.
    return out2d.reshape(B, S, E)


def _reference(hidden_states, wq, bq, wk, bk, wv, bv, wo, bo):
    q = hidden_states @ wq + bq
    k = hidden_states @ wk + bk
    v = hidden_states @ wv + bv

    def split(t):  # (B,S,E) -> (B,H,S,D)
        return t.reshape(B, S, H, D).transpose(0, 2, 1, 3)

    qh, kh, vh = split(q), split(k), split(v)
    s = jnp.einsum("bhqd,bhkd->bhqk", qh, kh) * SCALE
    p = jax.nn.softmax(s, axis=-1)
    o = jnp.einsum("bhqk,bhkd->bhqd", p, vh)
    o = o.transpose(0, 2, 1, 3).reshape(B, S, E)
    return o @ wo + bo


if __name__ == "__main__":
    key = jax.random.PRNGKey(0)
    keys = jax.random.split(key, 9)

    hidden_states = jax.random.normal(keys[0], (B, S, E), dtype=jnp.float32)

    # PyTorch nn.Linear weights are (out_features, in_features); init
    # deterministically then pre-transpose to (in, out) for x @ W + b.
    bound = 1.0 / math.sqrt(E)

    def init_linear(kw, kb):
        w_torch = jax.random.uniform(kw, (E, E), jnp.float32, -bound, bound)
        b_torch = jax.random.uniform(kb, (E,), jnp.float32, -bound, bound)
        return w_torch.T, b_torch

    wq, bq = init_linear(keys[1], keys[2])
    wk, bk = init_linear(keys[3], keys[4])
    wv, bv = init_linear(keys[5], keys[6])
    wo, bo = init_linear(keys[7], keys[8])

    out = pegasus_attention_forward(hidden_states, wq, bq, wk, bk, wv, bv, wo, bo)
    out = jax.block_until_ready(out)

    ref = _reference(hidden_states, wq, bq, wk, bk, wv, bv, wo, bo)
    assert out.shape == (B, S, E)
    # approx reciprocal in the softmax denominator costs a few mantissa bits vs
    # exact division; 2e-3 is well above that and far below any structural bug.
    assert jnp.allclose(out, ref, atol=2e-3, rtol=2e-3), "mismatch vs reference"

    print("KERNEL_OK")
</pallas_src>

<mosaic_0001>
module attributes {stable_mosaic.version = 11 : i64} {
  func.func @_attn_kernel(%arg0: memref<16x32xf32, #tpu.memory_space<vmem>>, %arg1: memref<32x96xf32, #tpu.memory_space<vmem>>, %arg2: memref<1x96xf32, #tpu.memory_space<vmem>>, %arg3: memref<4x8x32xf32, #tpu.memory_space<vmem>>, %arg4: memref<1x32xf32, #tpu.memory_space<vmem>>, %arg5: memref<16x32xf32, #tpu.memory_space<vmem>>, %arg6: memref<4x2x8x24xf32, #tpu.memory_space<vmem>>) attributes {dimension_semantics = [], scalar_prefetch = 0 : i64, scratch_operands = 1 : i64, tpu.core_type = #tpu.core_type<tc>} {
    %c0 = arith.constant 0 : index
    %c0_0 = arith.constant 0 : index
    %0 = vector.load %arg0[%c0, %c0_0] : memref<16x32xf32, #tpu.memory_space<vmem>>, vector<16x32xf32>
    %c0_1 = arith.constant 0 : index
    %c0_2 = arith.constant 0 : index
    %1 = vector.load %arg1[%c0_1, %c0_2] : memref<32x96xf32, #tpu.memory_space<vmem>>, vector<32x96xf32>
    %cst = arith.constant dense<0.000000e+00> : vector<16x96xf32>
    %2 = tpu.matmul %0, %1, %cst {dimension_numbers = #tpu.dot_dimension_numbers<[1], [0], [0], [1], [0, 0, 1, 1], [], []>} : vector<16x32xf32>, vector<32x96xf32>, vector<16x96xf32> -> vector<16x96xf32>
    %c0_3 = arith.constant 0 : index
    %c0_4 = arith.constant 0 : index
    %3 = vector.load %arg2[%c0_3, %c0_4] : memref<1x96xf32, #tpu.memory_space<vmem>>, vector<1x96xf32>
    %4 = vector.broadcast %3 : vector<1x96xf32> to vector<16x96xf32>
    %5 = arith.addf %2, %4 : vector<16x96xf32>
    %6 = vector.extract_strided_slice %5 {offsets = [0, 0], sizes = [16, 24], strides = [1, 1]} : vector<16x96xf32> to vector<16x24xf32>
    %7 = vector.shape_cast %6 : vector<16x24xf32> to vector<2x8x24xf32>
    %c0_5 = arith.constant 0 : index
    %c0_6 = arith.constant 0 : index
    %c0_7 = arith.constant 0 : index
    %c0_8 = arith.constant 0 : index
    %8 = vector.load %arg6[%c0_5, %c0_6, %c0_7, %c0_8] : memref<4x2x8x24xf32, #tpu.memory_space<vmem>>, vector<1x2x8x24xf32>
    %9 = vector.shape_cast %8 : vector<1x2x8x24xf32> to vector<2x8x24xf32>
    %10 = vector.shape_cast %7 : vector<2x8x24xf32> to vector<1x2x8x24xf32>
    tpu.vector_store %arg6[%c0_5, %c0_6, %c0_7, %c0_8], %10 {strides = array<i32>} : memref<4x2x8x24xf32, #tpu.memory_space<vmem>>, vector<1x2x8x24xf32>,
    %11 = vector.extract_strided_slice %5 {offsets = [0, 24], sizes = [16, 24], strides = [1, 1]} : vector<16x96xf32> to vector<16x24xf32>
    %12 = vector.shape_cast %11 : vector<16x24xf32> to vector<2x8x24xf32>
    %c1 = arith.constant 1 : index
    %c0_9 = arith.constant 0 : index
    %c0_10 = arith.constant 0 : index
    %c0_11 = arith.constant 0 : index
    %13 = vector.load %arg6[%c1, %c0_9, %c0_10, %c0_11] : memref<4x2x8x24xf32, #tpu.memory_space<vmem>>, vector<1x2x8x24xf32>
    %14 = vector.shape_cast %13 : vector<1x2x8x24xf32> to vector<2x8x24xf32>
    %15 = vector.shape_cast %12 : vector<2x8x24xf32> to vector<1x2x8x24xf32>
    tpu.vector_store %arg6[%c1, %c0_9, %c0_10, %c0_11], %15 {strides = array<i32>} : memref<4x2x8x24xf32, #tpu.memory_space<vmem>>, vector<1x2x8x24xf32>,
    %16 = vector.extract_strided_slice %5 {offsets = [0, 48], sizes = [16, 24], strides = [1, 1]} : vector<16x96xf32> to vector<16x24xf32>
    %17 = vector.shape_cast %16 : vector<16x24xf32> to vector<2x8x24xf32>
    %c2 = arith.constant 2 : index
    %c0_12 = arith.constant 0 : index
    %c0_13 = arith.constant 0 : index
    %c0_14 = arith.constant 0 : index
    %18 = vector.load %arg6[%c2, %c0_12, %c0_13, %c0_14] : memref<4x2x8x24xf32, #tpu.memory_space<vmem>>, vector<1x2x8x24xf32>
    %19 = vector.shape_cast %18 : vector<1x2x8x24xf32> to vector<2x8x24xf32>
    %20 = vector.shape_cast %17 : vector<2x8x24xf32> to vector<1x2x8x24xf32>
    tpu.vector_store %arg6[%c2, %c0_12, %c0_13, %c0_14], %20 {strides = array<i32>} : memref<4x2x8x24xf32, #tpu.memory_space<vmem>>, vector<1x2x8x24xf32>,
    %21 = vector.extract_strided_slice %5 {offsets = [0, 72], sizes = [16, 24], strides = [1, 1]} : vector<16x96xf32> to vector<16x24xf32>
    %22 = vector.shape_cast %21 : vector<16x24xf32> to vector<2x8x24xf32>
    %c3 = arith.constant 3 : index
    %c0_15 = arith.constant 0 : index
    %c0_16 = arith.constant 0 : index
    %c0_17 = arith.constant 0 : index
    %23 = vector.load %arg6[%c3, %c0_15, %c0_16, %c0_17] : memref<4x2x8x24xf32, #tpu.memory_space<vmem>>, vector<1x2x8x24xf32>
    %24 = vector.shape_cast %23 : vector<1x2x8x24xf32> to vector<2x8x24xf32>
    %25 = vector.shape_cast %22 : vector<2x8x24xf32> to vector<1x2x8x24xf32>
    tpu.vector_store %arg6[%c3, %c0_15, %c0_16, %c0_17], %25 {strides = array<i32>} : memref<4x2x8x24xf32, #tpu.memory_space<vmem>>, vector<1x2x8x24xf32>,
    %c0_18 = arith.constant 0 : index
    %c0_19 = arith.constant 0 : index
    %c0_20 = arith.constant 0 : index
    %c0_21 = arith.constant 0 : index
    %26 = vector.load %arg6[%c0_18, %c0_19, %c0_20, %c0_21] : memref<4x2x8x24xf32, #tpu.memory_space<vmem>>, vector<4x2x8x24xf32>
    %27 = vector.shape_cast %26 : vector<4x2x8x24xf32> to vector<8x8x24xf32>
    %28 = vector.extract_strided_slice %27 {offsets = [0, 0, 0], sizes = [8, 8, 8], strides = [1, 1, 1]} : vector<8x8x24xf32> to vector<8x8x8xf32>
    %29 = vector.extract_strided_slice %27 {offsets = [0, 0, 8], sizes = [8, 8, 8], strides = [1, 1, 1]} : vector<8x8x24xf32> to vector<8x8x8xf32>
    %30 = vector.extract_strided_slice %27 {offsets = [0, 0, 16], sizes = [8, 8, 8], strides = [1, 1, 1]} : vector<8x8x24xf32> to vector<8x8x8xf32>
    "tpu.trace_start"() <{level = 10 : i32, message = "nqd,nkd->nqk"}> : () -> ()
    %cst_22 = arith.constant dense<0.000000e+00> : vector<8x8x8xf32>
    %31 = tpu.matmul %28, %29, %cst_22 {dimension_numbers = #tpu.dot_dimension_numbers<[2], [2], [1], [1], [0, 0, 0, 1, 1, 1], [0], [0]>} : vector<8x8x8xf32>, vector<8x8x8xf32>, vector<8x8x8xf32> -> vector<8x8x8xf32>
    "tpu.trace_stop"() : () -> ()
    %cst_23 = arith.constant 0.353553385 : f32
    %32 = vector.broadcast %cst_23 : f32 to vector<8x8x8xf32>
    %33 = arith.mulf %31, %32 : vector<8x8x8xf32>
    %cst_24 = arith.constant dense<0xFF800000> : vector<8x8xf32>
    %34 = vector.multi_reduction <maximumf>, %33, %cst_24 [2] : vector<8x8x8xf32> to vector<8x8xf32>
    %35 = vector.shape_cast %34 : vector<8x8xf32> to vector<8x8x1xf32>
    %36 = vector.broadcast %35 : vector<8x8x1xf32> to vector<8x8x8xf32>
    %37 = arith.subf %33, %36 : vector<8x8x8xf32>
    %38 = math.exp %37 : vector<8x8x8xf32>
    %cst_25 = arith.constant dense<0.000000e+00> : vector<8x8xf32>
    %39 = vector.multi_reduction <add>, %38, %cst_25 [2] : vector<8x8x8xf32> to vector<8x8xf32>
    %40 = vector.shape_cast %39 : vector<8x8xf32> to vector<8x8x1xf32>
    %41 = tpu.reciprocal %40 {approx = true} : vector<8x8x1xf32> -> vector<8x8x1xf32>
    %42 = vector.broadcast %41 : vector<8x8x1xf32> to vector<8x8x8xf32>
    %43 = arith.mulf %38, %42 : vector<8x8x8xf32>
    "tpu.trace_start"() <{level = 10 : i32, message = "nqk,nkd->nqd"}> : () -> ()
    %cst_26 = arith.constant dense<0.000000e+00> : vector<8x8x8xf32>
    %44 = tpu.matmul %43, %30, %cst_26 {dimension_numbers = #tpu.dot_dimension_numbers<[2], [1], [1], [2], [0, 0, 0, 1, 1, 2], [0], [0]>} : vector<8x8x8xf32>, vector<8x8x8xf32>, vector<8x8x8xf32> -> vector<8x8x8xf32>
    "tpu.trace_stop"() : () -> ()
    %45 = vector.shape_cast %44 : vector<8x8x8xf32> to vector<4x16x8xf32>
    %c0_27 = arith.constant 0 : index
    %c0_28 = arith.constant 0 : index
    %c0_29 = arith.constant 0 : index
    %46 = vector.load %arg3[%c0_27, %c0_28, %c0_29] : memref<4x8x32xf32, #tpu.memory_space<vmem>>, vector<4x8x32xf32>
    "tpu.trace_start"() <{level = 10 : i32, message = "hrd,hde->hre"}> : () -> ()
    %cst_30 = arith.constant dense<0.000000e+00> : vector<4x16x32xf32>
    %47 = tpu.matmul %45, %46, %cst_30 {dimension_numbers = #tpu.dot_dimension_numbers<[2], [1], [1], [2], [0, 0, 0, 1, 1, 2], [0], [0]>} : vector<4x16x8xf32>, vector<4x8x32xf32>, vector<4x16x32xf32> -> vector<4x16x32xf32>
    "tpu.trace_stop"() : () -> ()
    %cst_31 = arith.constant dense<0.000000e+00> : vector<16x32xf32>
    %48 = vector.multi_reduction <add>, %47, %cst_31 [0] : vector<4x16x32xf32> to vector<16x32xf32>
    %c0_32 = arith.constant 0 : index
    %c0_33 = arith.constant 0 : index
    %49 = vector.load %arg4[%c0_32, %c0_33] : memref<1x32xf32, #tpu.memory_space<vmem>>, vector<1x32xf32>
    %50 = vector.broadcast %49 : vector<1x32xf32> to vector<16x32xf32>
    %51 = arith.addf %48, %50 : vector<16x32xf32>
    %c0_34 = arith.constant 0 : index
    %c0_35 = arith.constant 0 : index
    %52 = vector.load %arg5[%c0_34, %c0_35] : memref<16x32xf32, #tpu.memory_space<vmem>>, vector<16x32xf32>
    tpu.vector_store %arg5[%c0_34, %c0_35], %51 {strides = array<i32>} : memref<16x32xf32, #tpu.memory_space<vmem>>, vector<16x32xf32>,
    return
  }
}

</mosaic_0001>

<llo_original>
// kernel: tpu_custom_call.1
$region0: #{tpu_custom_call.1}
  #allocation0 [shape = 'u32[]', space=smem, size = 0x4, offset = 0x4, fixed_abs, tag = 'smem constant byte address 0x4 - core index']
  #allocation1 [shape = 'u32[72,128]{1,0:T(1,128)}', space=vmem, size = 0x9000, scoped, tag = 'internal scratch']
  #allocation2 [shape = 'f32[4,2,8,24]{3,2,1,0:T(8,128)}', space=vmem, size = 0x8000, scoped, tag = 'scratch operand']
  %s0 = inlined_call_operand.hbm [shape: f32[16,32], index: 0, kind: input, shape index: {}]
  %s1 = inlined_call_operand.hbm [shape: f32[32,96], index: 1, kind: input, shape index: {}]
  %s2 = inlined_call_operand.vmem [shape: f32[1,96], index: 2, kind: input, shape index: {}]
  %s3 = inlined_call_operand.hbm [shape: f32[4,8,32], index: 3, kind: input, shape index: {}]
  %s4 = inlined_call_operand.vmem [shape: f32[1,32], index: 4, kind: input, shape index: {}]
  %s5 = inlined_call_operand.hbm [shape: f32[16,32], index: 5, kind: output, shape index: {}]
  %s6 = sld [smem:[#allocation0]]
  $region42: #{tpu_custom_call.1} parent=0
    _
  %s8 = ssub.s32 1, %s6
  %s9 = scalar_select 0, %s8, %s6
  $region1: #{tpu_custom_call.1} parent=0
    #allocation3 [shape = 'u8[8192]{0}', space=vmem, size = 0x2000, scoped, tag = 'input window, operand 0, single buffered']
    #allocation4 [shape = 's32[1]{0}', space=sflag, size = 0x4, scoped, tag = 'scoped memory for tpu_custom_call.1']
    #allocation5 [shape = 's32[1]{0}', space=sflag, size = 0x4, scoped, tag = 'scoped memory for tpu_custom_call.1']
    #allocation6 [shape = 'u8[16384]{0}', space=vmem, size = 0x4000, scoped, tag = 'input window, operand 1, single buffered']
    #allocation7 [shape = 's32[1]{0}', space=sflag, size = 0x4, scoped, tag = 'scoped memory for tpu_custom_call.1']
    #allocation8 [shape = 'u8[16384]{0}', space=vmem, size = 0x4000, scoped, tag = 'input window, operand 3, single buffered']
    #allocation9 [shape = 'u8[8192]{0}', space=vmem, size = 0x2000, scoped, tag = 'output window, operand 0, single buffered']
    %10 = vsyncpa [#allocation4], 0
    %11 = vsyncpa [#allocation7], 0
    %12 = vsyncpa [#allocation5], 0
    // Predicated region
    $region2: #{tpu_custom_call.1} parent=1 // pred_check
      _
    $region3: #{tpu_custom_call.1} parent=1 // pred_check_branch
      %14 = sbr.rel (0) target = $region5
    $region4: #{tpu_custom_call.1} parent=1 // pred_region
      %16 = vsyncadd [#allocation4], 0
      %s17 = sshll.u32 %s0, 4
      %s18 = int_to_ptr.hbm [resolvable:$true] %s17
      %s19 = sshll.u32 [#allocation3], 4
      %s20 = int_to_ptr.vmem [resolvable:$true] %s19
      %25 = dma.hbm_to_vmem [thread:$0]  %s18, 256, %s20, [#allocation4], 128, 128, 8
    $region5: #{tpu_custom_call.1} parent=1 // pred_fallthru
      _
    // Predicated region
    $region6: #{tpu_custom_call.1} parent=1 // pred_check
      _
    $region7: #{tpu_custom_call.1} parent=1 // pred_check_branch
      %27 = sbr.rel (0) target = $region9
    $region8: #{tpu_custom_call.1} parent=1 // pred_region
      %29 = vsyncadd [#allocation7], 0
      %s30 = sshll.u32 %s1, 4
      %s31 = int_to_ptr.hbm [resolvable:$true] %s30
      %s32 = sshll.u32 [#allocation6], 4
      %s33 = int_to_ptr.vmem [resolvable:$true] %s32
      %38 = dma.hbm_to_vmem [thread:$0]  %s31, 512, %s33, [#allocation7], 128, 128, 8
    $region9: #{tpu_custom_call.1} parent=1 // pred_fallthru
      _
    // Predicated region
    $region10: #{tpu_custom_call.1} parent=1 // pred_check
      _
    $region11: #{tpu_custom_call.1} parent=1 // pred_check_branch
      %40 = sbr.rel (0) target = $region13
    $region12: #{tpu_custom_call.1} parent=1 // pred_region
      _
    $region13: #{tpu_custom_call.1} parent=1 // pred_fallthru
      _
    // Predicated region
    $region14: #{tpu_custom_call.1} parent=1 // pred_check
      _
    $region15: #{tpu_custom_call.1} parent=1 // pred_check_branch
      %42 = sbr.rel (0) target = $region17
    $region16: #{tpu_custom_call.1} parent=1 // pred_region
      %44 = vsyncadd [#allocation7], 0
      %s45 = sshll.u32 %s3, 4
      %s46 = int_to_ptr.hbm [resolvable:$true] %s45
      %s47 = sshll.u32 [#allocation8], 4
      %s48 = int_to_ptr.vmem [resolvable:$true] %s47
      %53 = dma.hbm_to_vmem [thread:$0]  %s46, 512, %s48, [#allocation7], 128, 128, 8
    $region17: #{tpu_custom_call.1} parent=1 // pred_fallthru
      _
    // Predicated region
    $region18: #{tpu_custom_call.1} parent=1 // pred_check
      _
    $region19: #{tpu_custom_call.1} parent=1 // pred_check_branch
      %55 = sbr.rel (0) target = $region21
    $region20: #{tpu_custom_call.1} parent=1 // pred_region
      _
    $region21: #{tpu_custom_call.1} parent=1 // pred_fallthru
      _
    // Predicated region
    $region22: #{tpu_custom_call.1} parent=1 // pred_check
      _
    $region23: #{tpu_custom_call.1} parent=1 // pred_check_branch
      %57 = sbr.rel (0) target = $region25
    $region24: #{tpu_custom_call.1} parent=1 // pred_region
      %59 = dma.done [#allocation4], 256
    $region25: #{tpu_custom_call.1} parent=1 // pred_fallthru
      _
    // Predicated region
    $region26: #{tpu_custom_call.1} parent=1 // pred_check
      _
    $region27: #{tpu_custom_call.1} parent=1 // pred_check_branch
      %61 = sbr.rel (0) target = $region29
    $region28: #{tpu_custom_call.1} parent=1 // pred_region
      %63 = dma.done [#allocation7], 512
    $region29: #{tpu_custom_call.1} parent=1 // pred_fallthru
      _
    // Predicated region
    $region30: #{tpu_custom_call.1} parent=1 // pred_check
      _
    $region31: #{tpu_custom_call.1} parent=1 // pred_check_branch
      %65 = sbr.rel (0) target = $region33
    $region32: #{tpu_custom_call.1} parent=1 // pred_region
      %67 = dma.done [#allocation7], 512
    $region33: #{tpu_custom_call.1} parent=1 // pred_fallthru
      _
    %v68 = vld [vmem:[#allocation3] sm:$0xff]
    %v69 = vld [vmem:[#allocation3 + $0x8] sm:$0xff]
    %v70 = vld [vmem:[#allocation6] sm:$0xff]
    %v71 = vld [vmem:[#allocation6 + $0x8] sm:$0xff]
    %v72 = vld [vmem:[#allocation6 + $0x10] sm:$0xff]
    %v73 = vld [vmem:[#allocation6 + $0x18] sm:$0xff]
    %v74 = vld [vmem:[%s2] sm:$0x1]
    %v76 = vperm.slane %v74, 0
    %vm78 = vcmask 261120
    %v80 = vsel %vm78, %v68, 0
    %v83 = vsel %vm78, %v69, 0
    %85 = vmatpush.msra.mxu0 0.0
    %86 = vmatpush.msra.mxu0 0.0
    %87 = vmatpush.msra.mxu0 0.0
    %88 = vmatpush.msra.mxu0 0.0
    %89 = vmatpush.msra.mxu0 0.0
    %90 = vmatpush.msra.mxu0 0.0
    %91 = vmatpush.msra.mxu0 0.0
    %92 = vmatpush.msra.mxu0 0.0
    %93 = vmatpush.msra.mxu0 0.0
    %94 = vmatpush.msra.mxu0 0.0
    %95 = vmatpush.msra.mxu0 0.0
    %96 = vmatpush.msra.mxu0 0.0
    %97 = vmatpush.msra.mxu0 %v73
    %98 = vmatpush.msra.mxu0 %v72
    %99 = vmatpush.msra.mxu0 %v71
    %100 = vmatpush.msra.mxu0 %v70
    %101 = vmatmul.f32.gmra.mxu0 %v80
    %v102 = vpop.f32.mrf.mxu0
    %v103 = vadd.f32 %v76, %v102
    %104 = vmatmul.f32.gmra.mxu0 %v83
    %v105 = vpop.f32.mrf.mxu0
    %v106 = vadd.f32 %v76, %v105
    %107 = vdwg.mxu0
    %vm108 = vcmask 195584
    %109 = vst.msk [vmem:[#allocation2] sm:$0xff] %vm108, %v103
    %110 = vst.msk [vmem:[#allocation2 + $0x8] sm:$0xff] %vm108, %v106
    %113 = vrot.lane.b32.xlu0 %v103, 104
    %v114 = vpop.permute.xlu0 %113
    %115 = vrot.lane.b32.xlu0 %v106, 104
    %v116 = vpop.permute.xlu0 %115
    %s119 = scalar_lea.vmem [#allocation2], 16
    %120 = vst.msk [vmem:[%s119] sm:$0xff] %vm108, %v114
    %121 = vst.msk [vmem:[%s119 + $0x8] sm:$0xff] %vm108, %v116
    %122 = vrot.lane.b32.xlu0 %v103, 80
    %v123 = vpop.permute.xlu0 %122
    %124 = vrot.lane.b32.xlu0 %v106, 80
    %v125 = vpop.permute.xlu0 %124
    %s128 = scalar_lea.vmem [#allocation2], 32
    %129 = vst.msk [vmem:[%s128] sm:$0xff] %vm108, %v123
    %130 = vst.msk [vmem:[%s128 + $0x8] sm:$0xff] %vm108, %v125
    %131 = vrot.lane.b32.xlu0 %v103, 56
    %v132 = vpop.permute.xlu0 %131
    %133 = vrot.lane.b32.xlu0 %v106, 56
    %v134 = vpop.permute.xlu0 %133
    %s137 = scalar_lea.vmem [#allocation2], 48
    %138 = vst.msk [vmem:[%s137] sm:$0xff] %vm108, %v132
    %139 = vst.msk [vmem:[%s137 + $0x8] sm:$0xff] %vm108, %v134
    %v140 = vld [vmem:[#allocation2] sm:$0xff]
    %v141 = vld [vmem:[#allocation2 + $0x8] sm:$0xff]
    %v142 = vld [vmem:[#allocation2 + $0x10] sm:$0xff]
    %v143 = vld [vmem:[#allocation2 + $0x18] sm:$0xff]
    %v144 = vld [vmem:[#allocation2 + $0x20] sm:$0xff]
    %v145 = vld [vmem:[#allocation2 + $0x28] sm:$0xff]
    %v146 = vld [vmem:[#allocation2 + $0x30] sm:$0xff]
    %v147 = vld [vmem:[#allocation2 + $0x38] sm:$0xff]
    %149 = vrot.lane.b32.xlu0 %v140, 120
    %v150 = vpop.permute.xlu0 %149
    %vm151 = vcmask 64512
    %v152 = vsel %vm151, %v140, 0
    %v154 = vsel %vm151, %v150, 0
    %156 = vmatpush.xpose.msra.mxu0 0.0
    %157 = vmatpush.xpose.msra.mxu0 0.0
    %158 = vmatpush.xpose.msra.mxu0 0.0
    %159 = vmatpush.xpose.msra.mxu0 0.0
    %160 = vmatpush.xpose.msra.mxu0 0.0
    %161 = vmatpush.xpose.msra.mxu0 0.0
    %162 = vmatpush.xpose.msra.mxu0 0.0
    %163 = vmatpush.xpose.msra.mxu0 0.0
    %164 = vmatpush.xpose.msra.mxu0 0.0
    %165 = vmatpush.xpose.msra.mxu0 0.0
    %166 = vmatpush.xpose.msra.mxu0 0.0
    %167 = vmatpush.xpose.msra.mxu0 0.0
    %168 = vmatpush.xpose.msra.mxu0 0.0
    %169 = vmatpush.xpose.msra.mxu0 0.0
    %170 = vmatpush.xpose.msra.mxu0 0.0
    %171 = vmatpush.xpose.msra.mxu0 %v154
    %172 = vmatmul.f32.gmra.mxu0 %v152
    %v173 = vpop.f32.mrf.mxu0
    %v174 = vadd.f32 0.0, %v173
    %175 = vdwg.mxu0
    %177 = vrot.lane.b32.xlu0 %v141, 120
    %v178 = vpop.permute.xlu0 %177
    %v179 = vsel %vm151, %v141, 0
    %v181 = vsel %vm151, %v178, 0
    %183 = vmatpush.xpose.msra.mxu0 0.0
    %184 = vmatpush.xpose.msra.mxu0 0.0
    %185 = vmatpush.xpose.msra.mxu0 0.0
    %186 = vmatpush.xpose.msra.mxu0 0.0
    %187 = vmatpush.xpose.msra.mxu0 0.0
    %188 = vmatpush.xpose.msra.mxu0 0.0
    %189 = vmatpush.xpose.msra.mxu0 0.0
    %190 = vmatpush.xpose.msra.mxu0 0.0
    %191 = vmatpush.xpose.msra.mxu0 0.0
    %192 = vmatpush.xpose.msra.mxu0 0.0
    %193 = vmatpush.xpose.msra.mxu0 0.0
    %194 = vmatpush.xpose.msra.mxu0 0.0
    %195 = vmatpush.xpose.msra.mxu0 0.0
    %196 = vmatpush.xpose.msra.mxu0 0.0
    %197 = vmatpush.xpose.msra.mxu0 0.0
    %198 = vmatpush.xpose.msra.mxu0 %v181
    %199 = vmatmul.f32.gmra.mxu0 %v179
    %v200 = vpop.f32.mrf.mxu0
    %v201 = vadd.f32 0.0, %v200
    %202 = vdwg.mxu0
    %204 = vrot.lane.b32.xlu0 %v142, 120
    %v205 = vpop.permute.xlu0 %204
    %v206 = vsel %vm151, %v142, 0
    %v208 = vsel %vm151, %v205, 0
    %210 = vmatpush.xpose.msra.mxu0 0.0
    %211 = vmatpush.xpose.msra.mxu0 0.0
    %212 = vmatpush.xpose.msra.mxu0 0.0
    %213 = vmatpush.xpose.msra.mxu0 0.0
    %214 = vmatpush.xpose.msra.mxu0 0.0
    %215 = vmatpush.xpose.msra.mxu0 0.0
    %216 = vmatpush.xpose.msra.mxu0 0.0
    %217 = vmatpush.xpose.msra.mxu0 0.0
    %218 = vmatpush.xpose.msra.mxu0 0.0
    %219 = vmatpush.xpose.msra.mxu0 0.0
    %220 = vmatpush.xpose.msra.mxu0 0.0
    %221 = vmatpush.xpose.msra.mxu0 0.0
    %222 = vmatpush.xpose.msra.mxu0 0.0
    %223 = vmatpush.xpose.msra.mxu0 0.0
    %224 = vmatpush.xpose.msra.mxu0 0.0
    %225 = vmatpush.xpose.msra.mxu0 %v208
    %226 = vmatmul.f32.gmra.mxu0 %v206
    %v227 = vpop.f32.mrf.mxu0
    %v228 = vadd.f32 0.0, %v227
    %229 = vdwg.mxu0
    %231 = vrot.lane.b32.xlu0 %v143, 120
    %v232 = vpop.permute.xlu0 %231
    %v233 = vsel %vm151, %v143, 0
    %v235 = vsel %vm151, %v232, 0
    %237 = vmatpush.xpose.msra.mxu0 0.0
    %238 = vmatpush.xpose.msra.mxu0 0.0
    %239 = vmatpush.xpose.msra.mxu0 0.0
    %240 = vmatpush.xpose.msra.mxu0 0.0
    %241 = vmatpush.xpose.msra.mxu0 0.0
    %242 = vmatpush.xpose.msra.mxu0 0.0
    %243 = vmatpush.xpose.msra.mxu0 0.0
    %244 = vmatpush.xpose.msra.mxu0 0.0
    %245 = vmatpush.xpose.msra.mxu0 0.0
    %246 = vmatpush.xpose.msra.mxu0 0.0
    %247 = vmatpush.xpose.msra.mxu0 0.0
    %248 = vmatpush.xpose.msra.mxu0 0.0
    %249 = vmatpush.xpose.msra.mxu0 0.0
    %250 = vmatpush.xpose.msra.mxu0 0.0
    %251 = vmatpush.xpose.msra.mxu0 0.0
    %252 = vmatpush.xpose.msra.mxu0 %v235
    %253 = vmatmul.f32.gmra.mxu0 %v233
    %v254 = vpop.f32.mrf.mxu0
    %v255 = vadd.f32 0.0, %v254
    %256 = vdwg.mxu0
    %258 = vrot.lane.b32.xlu0 %v144, 120
    %v259 = vpop.permute.xlu0 %258
    %v260 = vsel %vm151, %v144, 0
    %v262 = vsel %vm151, %v259, 0
    %264 = vmatpush.xpose.msra.mxu0 0.0
    %265 = vmatpush.xpose.msra.mxu0 0.0
    %266 = vmatpush.xpose.msra.mxu0 0.0
    %267 = vmatpush.xpose.msra.mxu0 0.0
    %268 = vmatpush.xpose.msra.mxu0 0.0
    %269 = vmatpush.xpose.msra.mxu0 0.0
    %270 = vmatpush.xpose.msra.mxu0 0.0
    %271 = vmatpush.xpose.msra.mxu0 0.0
    %272 = vmatpush.xpose.msra.mxu0 0.0
    %273 = vmatpush.xpose.msra.mxu0 0.0
    %274 = vmatpush.xpose.msra.mxu0 0.0
    %275 = vmatpush.xpose.msra.mxu0 0.0
    %276 = vmatpush.xpose.msra.mxu0 0.0
    %277 = vmatpush.xpose.msra.mxu0 0.0
    %278 = vmatpush.xpose.msra.mxu0 0.0
    %279 = vmatpush.xpose.msra.mxu0 %v262
    %280 = vmatmul.f32.gmra.mxu0 %v260
    %v281 = vpop.f32.mrf.mxu0
    %v282 = vadd.f32 0.0, %v281
    %283 = vdwg.mxu0
    %285 = vrot.lane.b32.xlu0 %v145, 120
    %v286 = vpop.permute.xlu0 %285
    %v287 = vsel %vm151, %v145, 0
    %v289 = vsel %vm151, %v286, 0
    %291 = vmatpush.xpose.msra.mxu0 0.0
    %292 = vmatpush.xpose.msra.mxu0 0.0
    %293 = vmatpush.xpose.msra.mxu0 0.0
    %294 = vmatpush.xpose.msra.mxu0 0.0
    %295 = vmatpush.xpose.msra.mxu0 0.0
    %296 = vmatpush.xpose.msra.mxu0 0.0
    %297 = vmatpush.xpose.msra.mxu0 0.0
    %298 = vmatpush.xpose.msra.mxu0 0.0
    %299 = vmatpush.xpose.msra.mxu0 0.0
    %300 = vmatpush.xpose.msra.mxu0 0.0
    %301 = vmatpush.xpose.msra.mxu0 0.0
    %302 = vmatpush.xpose.msra.mxu0 0.0
    %303 = vmatpush.xpose.msra.mxu0 0.0
    %304 = vmatpush.xpose.msra.mxu0 0.0
    %305 = vmatpush.xpose.msra.mxu0 0.0
    %306 = vmatpush.xpose.msra.mxu0 %v289
    %307 = vmatmul.f32.gmra.mxu0 %v287
    %v308 = vpop.f32.mrf.mxu0
    %v309 = vadd.f32 0.0, %v308
    %310 = vdwg.mxu0
    %312 = vrot.lane.b32.xlu0 %v146, 120
    %v313 = vpop.permute.xlu0 %312
    %v314 = vsel %vm151, %v146, 0
    %v316 = vsel %vm151, %v313, 0
    %318 = vmatpush.xpose.msra.mxu0 0.0
    %319 = vmatpush.xpose.msra.mxu0 0.0
    %320 = vmatpush.xpose.msra.mxu0 0.0
    %321 = vmatpush.xpose.msra.mxu0 0.0
    %322 = vmatpush.xpose.msra.mxu0 0.0
    %323 = vmatpush.xpose.msra.mxu0 0.0
    %324 = vmatpush.xpose.msra.mxu0 0.0
    %325 = vmatpush.xpose.msra.mxu0 0.0
    %326 = vmatpush.xpose.msra.mxu0 0.0
    %327 = vmatpush.xpose.msra.mxu0 0.0
    %328 = vmatpush.xpose.msra.mxu0 0.0
    %329 = vmatpush.xpose.msra.mxu0 0.0
    %330 = vmatpush.xpose.msra.mxu0 0.0
    %331 = vmatpush.xpose.msra.mxu0 0.0
    %332 = vmatpush.xpose.msra.mxu0 0.0
    %333 = vmatpush.xpose.msra.mxu0 %v316
    %334 = vmatmul.f32.gmra.mxu0 %v314
    %v335 = vpop.f32.mrf.mxu0
    %v336 = vadd.f32 0.0, %v335
    %337 = vdwg.mxu0
    %339 = vrot.lane.b32.xlu0 %v147, 120
    %v340 = vpop.permute.xlu0 %339
    %v341 = vsel %vm151, %v147, 0
    %v343 = vsel %vm151, %v340, 0
    %345 = vmatpush.xpose.msra.mxu0 0.0
    %346 = vmatpush.xpose.msra.mxu0 0.0
    %347 = vmatpush.xpose.msra.mxu0 0.0
    %348 = vmatpush.xpose.msra.mxu0 0.0
    %349 = vmatpush.xpose.msra.mxu0 0.0
    %350 = vmatpush.xpose.msra.mxu0 0.0
    %351 = vmatpush.xpose.msra.mxu0 0.0
    %352 = vmatpush.xpose.msra.mxu0 0.0
    %353 = vmatpush.xpose.msra.mxu0 0.0
    %354 = vmatpush.xpose.msra.mxu0 0.0
    %355 = vmatpush.xpose.msra.mxu0 0.0
    %356 = vmatpush.xpose.msra.mxu0 0.0
    %357 = vmatpush.xpose.msra.mxu0 0.0
    %358 = vmatpush.xpose.msra.mxu0 0.0
    %359 = vmatpush.xpose.msra.mxu0 0.0
    %360 = vmatpush.xpose.msra.mxu0 %v343
    %361 = vmatmul.f32.gmra.mxu0 %v341
    %v362 = vpop.f32.mrf.mxu0
    %v363 = vadd.f32 0.0, %v362
    %364 = vdwg.mxu0
    %v365 = vmul.f32 %v174, 0.35355338
    %v366 = vmul.f32 %v201, 0.35355338
    %v367 = vmul.f32 %v228, 0.35355338
    %v368 = vmul.f32 %v255, 0.35355338
    %v369 = vmul.f32 %v282, 0.35355338
    %v370 = vmul.f32 %v309, 0.35355338
    %v371 = vmul.f32 %v336, 0.35355338
    %v372 = vmul.f32 %v363, 0.35355338
    %v373 = vsel %vm151, %v365, -inf
    %374 = vmax.xlane.f32.xlu0 %v373
    %v375 = vpop.xlane.xlu0 %374
    %v376 = vsel %vm151, %v366, -inf
    %377 = vmax.xlane.f32.xlu0 %v376
    %v378 = vpop.xlane.xlu0 %377
    %v379 = vsel %vm151, %v367, -inf
    %380 = vmax.xlane.f32.xlu0 %v379
    %v381 = vpop.xlane.xlu0 %380
    %v382 = vsel %vm151, %v368, -inf
    %383 = vmax.xlane.f32.xlu0 %v382
    %v384 = vpop.xlane.xlu0 %383
    %v385 = vsel %vm151, %v369, -inf
    %386 = vmax.xlane.f32.xlu0 %v385
    %v387 = vpop.xlane.xlu0 %386
    %v388 = vsel %vm151, %v370, -inf
    %389 = vmax.xlane.f32.xlu0 %v388
    %v390 = vpop.xlane.xlu0 %389
    %v391 = vsel %vm151, %v371, -inf
    %392 = vmax.xlane.f32.xlu0 %v391
    %v393 = vpop.xlane.xlu0 %392
    %v394 = vsel %vm151, %v372, -inf
    %395 = vmax.xlane.f32.xlu0 %v394
    %v396 = vpop.xlane.xlu0 %395
    %v397 = vsub.f32 %v365, %v375
    %v398 = vsub.f32 %v366, %v378
    %v399 = vsub.f32 %v367, %v381
    %v400 = vsub.f32 %v368, %v384
    %v401 = vsub.f32 %v369, %v387
    %v402 = vsub.f32 %v370, %v390
    %v403 = vsub.f32 %v371, %v393
    %v404 = vsub.f32 %v372, %v396
    %v405 = vmul.f32 %v397, 1.442695
    %v406 = vpow.pop %v405
    %v407 = vmul.f32 %v398, 1.442695
    %v408 = vpow.pop %v407
    %v409 = vmul.f32 %v399, 1.442695
    %v410 = vpow.pop %v409
    %v411 = vmul.f32 %v400, 1.442695
    %v412 = vpow.pop %v411
    %v413 = vmul.f32 %v401, 1.442695
    %v414 = vpow.pop %v413
    %v415 = vmul.f32 %v402, 1.442695
    %v416 = vpow.pop %v415
    %v417 = vmul.f32 %v403, 1.442695
    %v418 = vpow.pop %v417
    %v419 = vmul.f32 %v404, 1.442695
    %v420 = vpow.pop %v419
    %v421 = vsel %vm151, %v406, 0.0
    %422 = vadd.xlane.f32.xlu0 %v421
    %v423 = vpop.xlane.xlu0 %422
    %v424 = vsel %vm151, %v408, 0.0
    %425 = vadd.xlane.f32.xlu0 %v424
    %v426 = vpop.xlane.xlu0 %425
    %v427 = vsel %vm151, %v410, 0.0
    %428 = vadd.xlane.f32.xlu0 %v427
    %v429 = vpop.xlane.xlu0 %428
    %v430 = vsel %vm151, %v412, 0.0
    %431 = vadd.xlane.f32.xlu0 %v430
    %v432 = vpop.xlane.xlu0 %431
    %v433 = vsel %vm151, %v414, 0.0
    %434 = vadd.xlane.f32.xlu0 %v433
    %v435 = vpop.xlane.xlu0 %434
    %v436 = vsel %vm151, %v416, 0.0
    %437 = vadd.xlane.f32.xlu0 %v436
    %v438 = vpop.xlane.xlu0 %437
    %v439 = vsel %vm151, %v418, 0.0
    %440 = vadd.xlane.f32.xlu0 %v439
    %v441 = vpop.xlane.xlu0 %440
    %v442 = vsel %vm151, %v420, 0.0
    %443 = vadd.xlane.f32.xlu0 %v442
    %v444 = vpop.xlane.xlu0 %443
    %v445 = vrcp.pop %v423
    %v446 = vrcp.pop %v426
    %v447 = vrcp.pop %v429
    %v448 = vrcp.pop %v432
    %v449 = vrcp.pop %v435
    %v450 = vrcp.pop %v438
    %v451 = vrcp.pop %v441
    %v452 = vrcp.pop %v444
    %v453 = vmul.f32 %v406, %v445
    %v454 = vmul.f32 %v408, %v446
    %v455 = vmul.f32 %v410, %v447
    %v456 = vmul.f32 %v412, %v448
    %v457 = vmul.f32 %v414, %v449
    %v458 = vmul.f32 %v416, %v450
    %v459 = vmul.f32 %v418, %v451
    %v460 = vmul.f32 %v420, %v452
    %461 = vrot.lane.b32.xlu0 %v140, 112
    %v462 = vpop.permute.xlu0 %461
    %v465 = vsel %vm151, %v453, 0
    %467 = vmatpush.msra.mxu0 0.0
    %468 = vmatpush.msra.mxu0 0.0
    %469 = vmatpush.msra.mxu0 0.0
    %470 = vmatpush.msra.mxu0 0.0
    %471 = vmatpush.msra.mxu0 0.0
    %472 = vmatpush.msra.mxu0 0.0
    %473 = vmatpush.msra.mxu0 0.0
    %474 = vmatpush.msra.mxu0 0.0
    %475 = vmatpush.msra.mxu0 0.0
    %476 = vmatpush.msra.mxu0 0.0
    %477 = vmatpush.msra.mxu0 0.0
    %478 = vmatpush.msra.mxu0 0.0
    %479 = vmatpush.msra.mxu0 0.0
    %480 = vmatpush.msra.mxu0 0.0
    %481 = vmatpush.msra.mxu0 0.0
    %482 = vmatpush.msra.mxu0 %v462
    %483 = vmatmul.f32.gmra.mxu0 %v465
    %v484 = vpop.f32.mrf.mxu0
    %v485 = vadd.f32 0.0, %v484
    %486 = vdwg.mxu0
    %487 = vrot.lane.b32.xlu0 %v141, 112
    %v488 = vpop.permute.xlu0 %487
    %v491 = vsel %vm151, %v454, 0
    %493 = vmatpush.msra.mxu0 0.0
    %494 = vmatpush.msra.mxu0 0.0
    %495 = vmatpush.msra.mxu0 0.0
    %496 = vmatpush.msra.mxu0 0.0
    %497 = vmatpush.msra.mxu0 0.0
    %498 = vmatpush.msra.mxu0 0.0
    %499 = vmatpush.msra.mxu0 0.0
    %500 = vmatpush.msra.mxu0 0.0
    %501 = vmatpush.msra.mxu0 0.0
    %502 = vmatpush.msra.mxu0 0.0
    %503 = vmatpush.msra.mxu0 0.0
    %504 = vmatpush.msra.mxu0 0.0
    %505 = vmatpush.msra.mxu0 0.0
    %506 = vmatpush.msra.mxu0 0.0
    %507 = vmatpush.msra.mxu0 0.0
    %508 = vmatpush.msra.mxu0 %v488
    %509 = vmatmul.f32.gmra.mxu0 %v491
    %v510 = vpop.f32.mrf.mxu0
    %v511 = vadd.f32 0.0, %v510
    %512 = vdwg.mxu0
    %513 = vrot.lane.b32.xlu0 %v142, 112
    %v514 = vpop.permute.xlu0 %513
    %v517 = vsel %vm151, %v455, 0
    %519 = vmatpush.msra.mxu0 0.0
    %520 = vmatpush.msra.mxu0 0.0
    %521 = vmatpush.msra.mxu0 0.0
    %522 = vmatpush.msra.mxu0 0.0
    %523 = vmatpush.msra.mxu0 0.0
    %524 = vmatpush.msra.mxu0 0.0
    %525 = vmatpush.msra.mxu0 0.0
    %526 = vmatpush.msra.mxu0 0.0
    %527 = vmatpush.msra.mxu0 0.0
    %528 = vmatpush.msra.mxu0 0.0
    %529 = vmatpush.msra.mxu0 0.0
    %530 = vmatpush.msra.mxu0 0.0
    %531 = vmatpush.msra.mxu0 0.0
    %532 = vmatpush.msra.mxu0 0.0
    %533 = vmatpush.msra.mxu0 0.0
    %534 = vmatpush.msra.mxu0 %v514
    %535 = vmatmul.f32.gmra.mxu0 %v517
    %v536 = vpop.f32.mrf.mxu0
    %v537 = vadd.f32 0.0, %v536
    %538 = vdwg.mxu0
    %539 = vrot.lane.b32.xlu0 %v143, 112
    %v540 = vpop.permute.xlu0 %539
    %v543 = vsel %vm151, %v456, 0
    %545 = vmatpush.msra.mxu0 0.0
    %546 = vmatpush.msra.mxu0 0.0
    %547 = vmatpush.msra.mxu0 0.0
    %548 = vmatpush.msra.mxu0 0.0
    %549 = vmatpush.msra.mxu0 0.0
    %550 = vmatpush.msra.mxu0 0.0
    %551 = vmatpush.msra.mxu0 0.0
    %552 = vmatpush.msra.mxu0 0.0
    %553 = vmatpush.msra.mxu0 0.0
    %554 = vmatpush.msra.mxu0 0.0
    %555 = vmatpush.msra.mxu0 0.0
    %556 = vmatpush.msra.mxu0 0.0
    %557 = vmatpush.msra.mxu0 0.0
    %558 = vmatpush.msra.mxu0 0.0
    %559 = vmatpush.msra.mxu0 0.0
    %560 = vmatpush.msra.mxu0 %v540
    %561 = vmatmul.f32.gmra.mxu0 %v543
    %v562 = vpop.f32.mrf.mxu0
    %v563 = vadd.f32 0.0, %v562
    %564 = vdwg.mxu0
    %565 = vrot.lane.b32.xlu0 %v144, 112
    %v566 = vpop.permute.xlu0 %565
    %v569 = vsel %vm151, %v457, 0
    %571 = vmatpush.msra.mxu0 0.0
    %572 = vmatpush.msra.mxu0 0.0
    %573 = vmatpush.msra.mxu0 0.0
    %574 = vmatpush.msra.mxu0 0.0
    %575 = vmatpush.msra.mxu0 0.0
    %576 = vmatpush.msra.mxu0 0.0
    %577 = vmatpush.msra.mxu0 0.0
    %578 = vmatpush.msra.mxu0 0.0
    %579 = vmatpush.msra.mxu0 0.0
    %580 = vmatpush.msra.mxu0 0.0
    %581 = vmatpush.msra.mxu0 0.0
    %582 = vmatpush.msra.mxu0 0.0
    %583 = vmatpush.msra.mxu0 0.0
    %584 = vmatpush.msra.mxu0 0.0
    %585 = vmatpush.msra.mxu0 0.0
    %586 = vmatpush.msra.mxu0 %v566
    %587 = vmatmul.f32.gmra.mxu0 %v569
    %v588 = vpop.f32.mrf.mxu0
    %v589 = vadd.f32 0.0, %v588
    %590 = vdwg.mxu0
    %591 = vrot.lane.b32.xlu0 %v145, 112
    %v592 = vpop.permute.xlu0 %591
    %v595 = vsel %vm151, %v458, 0
    %597 = vmatpush.msra.mxu0 0.0
    %598 = vmatpush.msra.mxu0 0.0
    %599 = vmatpush.msra.mxu0 0.0
    %600 = vmatpush.msra.mxu0 0.0
    %601 = vmatpush.msra.mxu0 0.0
    %602 = vmatpush.msra.mxu0 0.0
    %603 = vmatpush.msra.mxu0 0.0
    %604 = vmatpush.msra.mxu0 0.0
    %605 = vmatpush.msra.mxu0 0.0
    %606 = vmatpush.msra.mxu0 0.0
    %607 = vmatpush.msra.mxu0 0.0
    %608 = vmatpush.msra.mxu0 0.0
    %609 = vmatpush.msra.mxu0 0.0
    %610 = vmatpush.msra.mxu0 0.0
    %611 = vmatpush.msra.mxu0 0.0
    %612 = vmatpush.msra.mxu0 %v592
    %613 = vmatmul.f32.gmra.mxu0 %v595
    %v614 = vpop.f32.mrf.mxu0
    %v615 = vadd.f32 0.0, %v614
    %616 = vdwg.mxu0
    %617 = vrot.lane.b32.xlu0 %v146, 112
    %v618 = vpop.permute.xlu0 %617
    %v621 = vsel %vm151, %v459, 0
    %623 = vmatpush.msra.mxu0 0.0
    %624 = vmatpush.msra.mxu0 0.0
    %625 = vmatpush.msra.mxu0 0.0
    %626 = vmatpush.msra.mxu0 0.0
    %627 = vmatpush.msra.mxu0 0.0
    %628 = vmatpush.msra.mxu0 0.0
    %629 = vmatpush.msra.mxu0 0.0
    %630 = vmatpush.msra.mxu0 0.0
    %631 = vmatpush.msra.mxu0 0.0
    %632 = vmatpush.msra.mxu0 0.0
    %633 = vmatpush.msra.mxu0 0.0
    %634 = vmatpush.msra.mxu0 0.0
    %635 = vmatpush.msra.mxu0 0.0
    %636 = vmatpush.msra.mxu0 0.0
    %637 = vmatpush.msra.mxu0 0.0
    %638 = vmatpush.msra.mxu0 %v618
    %639 = vmatmul.f32.gmra.mxu0 %v621
    %v640 = vpop.f32.mrf.mxu0
    %v641 = vadd.f32 0.0, %v640
    %642 = vdwg.mxu0
    %643 = vrot.lane.b32.xlu0 %v147, 112
    %v644 = vpop.permute.xlu0 %643
    %v647 = vsel %vm151, %v460, 0
    %649 = vmatpush.msra.mxu0 0.0
    %650 = vmatpush.msra.mxu0 0.0
    %651 = vmatpush.msra.mxu0 0.0
    %652 = vmatpush.msra.mxu0 0.0
    %653 = vmatpush.msra.mxu0 0.0
    %654 = vmatpush.msra.mxu0 0.0
    %655 = vmatpush.msra.mxu0 0.0
    %656 = vmatpush.msra.mxu0 0.0
    %657 = vmatpush.msra.mxu0 0.0
    %658 = vmatpush.msra.mxu0 0.0
    %659 = vmatpush.msra.mxu0 0.0
    %660 = vmatpush.msra.mxu0 0.0
    %661 = vmatpush.msra.mxu0 0.0
    %662 = vmatpush.msra.mxu0 0.0
    %663 = vmatpush.msra.mxu0 0.0
    %664 = vmatpush.msra.mxu0 %v644
    %665 = vmatmul.f32.gmra.mxu0 %v647
    %v666 = vpop.f32.mrf.mxu0
    %v667 = vadd.f32 0.0, %v666
    %668 = vdwg.mxu0
    %v669 = vld [vmem:[#allocation8] sm:$0xff]
    %v670 = vld [vmem:[#allocation8 + $0x8] sm:$0xff]
    %v671 = vld [vmem:[#allocation8 + $0x10] sm:$0xff]
    %v672 = vld [vmem:[#allocation8 + $0x18] sm:$0xff]
    %v674 = vsel %vm151, %v485, 0
    %v677 = vsel %vm151, %v511, 0
    %679 = vmatpush.msra.mxu0 0.0
    %680 = vmatpush.msra.mxu0 0.0
    %681 = vmatpush.msra.mxu0 0.0
    %682 = vmatpush.msra.mxu0 0.0
    %683 = vmatpush.msra.mxu0 0.0
    %684 = vmatpush.msra.mxu0 0.0
    %685 = vmatpush.msra.mxu0 0.0
    %686 = vmatpush.msra.mxu0 0.0
    %687 = vmatpush.msra.mxu0 0.0
    %688 = vmatpush.msra.mxu0 0.0
    %689 = vmatpush.msra.mxu0 0.0
    %690 = vmatpush.msra.mxu0 0.0
    %691 = vmatpush.msra.mxu0 0.0
    %692 = vmatpush.msra.mxu0 0.0
    %693 = vmatpush.msra.mxu0 0.0
    %694 = vmatpush.msra.mxu0 %v669
    %695 = vmatmul.f32.gmra.mxu0 %v674
    %v696 = vpop.f32.mrf.mxu0
    %v697 = vadd.f32 0.0, %v696
    %698 = vmatmul.f32.gmra.mxu0 %v677
    %v699 = vpop.f32.mrf.mxu0
    %v700 = vadd.f32 0.0, %v699
    %701 = vdwg.mxu0
    %v703 = vsel %vm151, %v537, 0
    %v706 = vsel %vm151, %v563, 0
    %708 = vmatpush.msra.mxu0 0.0
    %709 = vmatpush.msra.mxu0 0.0
    %710 = vmatpush.msra.mxu0 0.0
    %711 = vmatpush.msra.mxu0 0.0
    %712 = vmatpush.msra.mxu0 0.0
    %713 = vmatpush.msra.mxu0 0.0
    %714 = vmatpush.msra.mxu0 0.0
    %715 = vmatpush.msra.mxu0 0.0
    %716 = vmatpush.msra.mxu0 0.0
    %717 = vmatpush.msra.mxu0 0.0
    %718 = vmatpush.msra.mxu0 0.0
    %719 = vmatpush.msra.mxu0 0.0
    %720 = vmatpush.msra.mxu0 0.0
    %721 = vmatpush.msra.mxu0 0.0
    %722 = vmatpush.msra.mxu0 0.0
    %723 = vmatpush.msra.mxu0 %v670
    %724 = vmatmul.f32.gmra.mxu0 %v703
    %v725 = vpop.f32.mrf.mxu0
    %v726 = vadd.f32 0.0, %v725
    %727 = vmatmul.f32.gmra.mxu0 %v706
    %v728 = vpop.f32.mrf.mxu0
    %v729 = vadd.f32 0.0, %v728
    %730 = vdwg.mxu0
    %v732 = vsel %vm151, %v589, 0
    %v735 = vsel %vm151, %v615, 0
    %737 = vmatpush.msra.mxu0 0.0
    %738 = vmatpush.msra.mxu0 0.0
    %739 = vmatpush.msra.mxu0 0.0
    %740 = vmatpush.msra.mxu0 0.0
    %741 = vmatpush.msra.mxu0 0.0
    %742 = vmatpush.msra.mxu0 0.0
    %743 = vmatpush.msra.mxu0 0.0
    %744 = vmatpush.msra.mxu0 0.0
    %745 = vmatpush.msra.mxu0 0.0
    %746 = vmatpush.msra.mxu0 0.0
    %747 = vmatpush.msra.mxu0 0.0
    %748 = vmatpush.msra.mxu0 0.0
    %749 = vmatpush.msra.mxu0 0.0
    %750 = vmatpush.msra.mxu0 0.0
    %751 = vmatpush.msra.mxu0 0.0
    %752 = vmatpush.msra.mxu0 %v671
    %753 = vmatmul.f32.gmra.mxu0 %v732
    %v754 = vpop.f32.mrf.mxu0
    %v755 = vadd.f32 0.0, %v754
    %756 = vmatmul.f32.gmra.mxu0 %v735
    %v757 = vpop.f32.mrf.mxu0
    %v758 = vadd.f32 0.0, %v757
    %759 = vdwg.mxu0
    %v761 = vsel %vm151, %v641, 0
    %v764 = vsel %vm151, %v667, 0
    %766 = vmatpush.msra.mxu0 0.0
    %767 = vmatpush.msra.mxu0 0.0
    %768 = vmatpush.msra.mxu0 0.0
    %769 = vmatpush.msra.mxu0 0.0
    %770 = vmatpush.msra.mxu0 0.0
    %771 = vmatpush.msra.mxu0 0.0
    %772 = vmatpush.msra.mxu0 0.0
    %773 = vmatpush.msra.mxu0 0.0
    %774 = vmatpush.msra.mxu0 0.0
    %775 = vmatpush.msra.mxu0 0.0
    %776 = vmatpush.msra.mxu0 0.0
    %777 = vmatpush.msra.mxu0 0.0
    %778 = vmatpush.msra.mxu0 0.0
    %779 = vmatpush.msra.mxu0 0.0
    %780 = vmatpush.msra.mxu0 0.0
    %781 = vmatpush.msra.mxu0 %v672
    %782 = vmatmul.f32.gmra.mxu0 %v761
    %v783 = vpop.f32.mrf.mxu0
    %v784 = vadd.f32 0.0, %v783
    %785 = vmatmul.f32.gmra.mxu0 %v764
    %v786 = vpop.f32.mrf.mxu0
    %v787 = vadd.f32 0.0, %v786
    %788 = vdwg.mxu0
    %v789 = vsel %vm78, %v697, 0.0
    %v790 = vsel %vm78, %v726, 0.0
    %v791 = vadd.f32 %v789, %v790
    %v792 = vsel %vm78, %v755, 0.0
    %v793 = vadd.f32 %v791, %v792
    %v794 = vsel %vm78, %v784, 0.0
    %v795 = vadd.f32 %v793, %v794
    %v796 = vsel %vm78, %v700, 0.0
    %v797 = vsel %vm78, %v729, 0.0
    %v798 = vadd.f32 %v796, %v797
    %v799 = vsel %vm78, %v758, 0.0
    %v800 = vadd.f32 %v798, %v799
    %v801 = vsel %vm78, %v787, 0.0
    %v802 = vadd.f32 %v800, %v801
    %v803 = vld [vmem:[%s4] sm:$0x1]
    %v805 = vperm.slane %v803, 0
    %v807 = vadd.f32 %v795, %v805
    %v808 = vadd.f32 %v802, %v805
    %809 = vst.msk [vmem:[#allocation9] sm:$0xff] %vm78, %v807
    %810 = vst.msk [vmem:[#allocation9 + $0x8] sm:$0xff] %vm78, %v808
    // Predicated region
    $region34: #{tpu_custom_call.1} parent=1 // pred_check
      _
    $region35: #{tpu_custom_call.1} parent=1 // pred_check_branch
      %812 = sbr.rel (0) target = $region37
    $region36: #{tpu_custom_call.1} parent=1 // pred_region
      %814 = vsyncadd [#allocation5], 0
      %s815 = sshll.u32 [#allocation9], 4
      %s816 = int_to_ptr.vmem [resolvable:$true] %s815
      %s817 = sshll.u32 %s5, 4
      %s818 = int_to_ptr.hbm [resolvable:$true] %s817
      %823 = dma.vmem_to_hbm [thread:$0]  %s816, 256, %s818, [#allocation5], 128, 128, 8
    $region37: #{tpu_custom_call.1} parent=1 // pred_fallthru
      _
    // Predicated region
    $region38: #{tpu_custom_call.1} parent=1 // pred_check
      _
    $region39: #{tpu_custom_call.1} parent=1 // pred_check_branch
      %825 = sbr.rel (0) target = $region41
    $region40: #{tpu_custom_call.1} parent=1 // pred_region
      %827 = dma.done [#allocation5], 256
    $region41: #{tpu_custom_call.1} parent=1 // pred_fallthru
      _
    %828 = vsyncpa [#allocation4], 1
    %829 = vsyncpa [#allocation7], 1
    %830 = vsyncpa [#allocation5], 1

</llo_original>
